<compile_context>
chip_gen: v7x
topology: tpu7x:2x2x1
jax: 0.10.0
libtpu: 0.0.40
codegen_flags: <defaults>
</compile_context>

<pallas_src>
import jax
import jax.numpy as jnp
from jax.experimental import pallas as pl
from jax.experimental.pallas import tpu as pltpu

_SUB = 8        # sublanes per vreg
_LANE = 128     # lanes per vreg
_VREG = _SUB * _LANE  # 1024 f32 elements


def _cdiv(a: int, b: int) -> int:
    return -(-a // b)


def _round_up(n: int, m: int) -> int:
    return _cdiv(n, m) * m


def linear_kernel(w_ref, b_ref, x_ref, o_ref):
    # w_ref: SMEM (K,)  f32 scalars
    # b_ref: SMEM (1,)  f32 scalar
    # x_ref: VMEM (K, 8, TB//8)  -- batch dense on (sublane, lane)
    # o_ref: VMEM (8, TB//8)     -- dense output slab, unmasked stores
    K = x_ref.shape[0]
    # Unrolled at trace time (K == 3): scalar-broadcast VPU FMAs on full vregs.
    acc = x_ref[0] * w_ref[0]
    for k in range(1, K):
        acc = acc + x_ref[k] * w_ref[k]
    o_ref[...] = (acc + b_ref[0]).astype(o_ref.dtype)


def multivariate_linear_regression(x, weight, bias, *, block_b=512 * 1024):
    """x: (B, K) f32, weight: (1, K) f32, bias: (1,) f32 -> (B, 1) f32."""
    B, K = x.shape
    out_features, K_w = weight.shape
    assert K_w == K and out_features == 1, "kernel specialised to nn.Linear(3, 1)"
    assert bias.shape == (out_features,)

    # Pick the number of batch tiles first, then the smallest vreg-multiple
    # tile that covers B -> exact grid division with <1 vreg-row of padding
    # per tile (never pads B up to a full block_b).
    n_blocks = _cdiv(B, block_b)
    tb = _round_up(_cdiv(B, n_blocks), _VREG)
    Bp = n_blocks * tb
    grid = (n_blocks,)

    # One fused XLA pad+transpose copy; the reshape to (K, 8, Bp//8) is free
    # metadata on the contiguous transposed buffer.
    x_t = jnp.pad(x.astype(jnp.float32), ((0, Bp - B), (0, 0))).T      # (K, Bp)
    x_t = x_t.reshape(K, _SUB, Bp // _SUB)                              # free

    w_flat = weight.reshape(K).astype(jnp.float32)          # (K,) -> SMEM
    b_flat = bias.reshape(out_features).astype(jnp.float32)  # (1,) -> SMEM

    y_dense = pl.pallas_call(
        linear_kernel,
        out_shape=jax.ShapeDtypeStruct((_SUB, Bp // _SUB), jnp.float32),
        grid=grid,
        in_specs=[
            pl.BlockSpec(memory_space=pltpu.MemorySpace.SMEM),      # weight
            pl.BlockSpec(memory_space=pltpu.MemorySpace.SMEM),      # bias
            pl.BlockSpec((K, _SUB, tb // _SUB), lambda i: (0, 0, i)),  # x tile
        ],
        out_specs=pl.BlockSpec((_SUB, tb // _SUB), lambda i: (0, i)),
        compiler_params=pltpu.CompilerParams(
            dimension_semantics=("parallel",),
            vmem_limit_bytes=32 * 1024 * 1024,
        ),
        cost_estimate=pl.CostEstimate(
            flops=2 * Bp * K,
            transcendentals=0,
            bytes_accessed=4 * (Bp * K + Bp + K + 1),
        ),
    )(w_flat, b_flat, x_t)

    # (8, Bp//8) -> (Bp,) is a free reshape of the contiguous buffer; slice off
    # the padded rows and restore the PyTorch nn.Linear output layout (B, 1).
    return y_dense.reshape(Bp)[:B].reshape(B, out_features)


if __name__ == "__main__":
    key = jax.random.PRNGKey(0)
    kx, kw, kb = jax.random.split(key, 3)

    batch, in_features, out_features = 8, 3, 1

    # Deterministic parameters (PyTorch nn.Linear shapes: W (1,3), b (1,)).
    x = jax.random.normal(kx, (batch, in_features), dtype=jnp.float32)
    weight = jax.random.uniform(
        kw, (out_features, in_features), dtype=jnp.float32, minval=-0.5, maxval=0.5
    )
    bias = jax.random.uniform(
        kb, (out_features,), dtype=jnp.float32, minval=-0.5, maxval=0.5
    )

    y = jax.block_until_ready(multivariate_linear_regression(x, weight, bias))
    y_ref = x @ weight.T + bias
    assert y.shape == (batch, out_features)
    assert jnp.allclose(y, y_ref, atol=1e-5, rtol=1e-5)

    # Exercise the multi-tile grid path (batch not a multiple of the tile).
    big = 3000
    xb = jax.random.normal(kx, (big, in_features), dtype=jnp.float32)
    yb = jax.block_until_ready(
        multivariate_linear_regression(xb, weight, bias, block_b=1024)
    )
    assert yb.shape == (big, out_features)
    assert jnp.allclose(yb, xb @ weight.T + bias, atol=1e-5, rtol=1e-5)

    print("KERNEL_OK")
</pallas_src>

<mosaic_0001>
module attributes {stable_mosaic.version = 11 : i64} {
  func.func @linear_kernel(%arg0: i32, %arg1: memref<3xf32, #tpu.memory_space<smem>>, %arg2: memref<1xf32, #tpu.memory_space<smem>>, %arg3: memref<3x8x128xf32, #tpu.memory_space<vmem>>, %arg4: memref<8x128xf32, #tpu.memory_space<vmem>>) attributes {dimension_semantics = [#tpu.dimension_semantics<parallel>], iteration_bounds = array<i64: 1>, scalar_prefetch = 0 : i64, scratch_operands = 0 : i64, tpu.core_type = #tpu.core_type<tc>, window_params = [{transform_indices = @transform_0, window_bounds = array<i64: 3>}, {transform_indices = @transform_1, window_bounds = array<i64: 1>}, {transform_indices = @transform_2, window_bounds = array<i64: 3, 8, 128>}, {transform_indices = @transform_3, window_bounds = array<i64: 8, 128>}]} {
    %c0 = arith.constant 0 : index
    %c0_0 = arith.constant 0 : index
    %c0_1 = arith.constant 0 : index
    %0 = vector.load %arg3[%c0, %c0_0, %c0_1] : memref<3x8x128xf32, #tpu.memory_space<vmem>>, vector<1x8x128xf32>
    %1 = vector.shape_cast %0 : vector<1x8x128xf32> to vector<8x128xf32>
    %c0_2 = arith.constant 0 : index
    %2 = memref.load %arg1[%c0_2] : memref<3xf32, #tpu.memory_space<smem>>
    %3 = vector.broadcast %2 : f32 to vector<8x128xf32>
    %4 = arith.mulf %1, %3 : vector<8x128xf32>
    %c1 = arith.constant 1 : index
    %c0_3 = arith.constant 0 : index
    %c0_4 = arith.constant 0 : index
    %5 = vector.load %arg3[%c1, %c0_3, %c0_4] : memref<3x8x128xf32, #tpu.memory_space<vmem>>, vector<1x8x128xf32>
    %6 = vector.shape_cast %5 : vector<1x8x128xf32> to vector<8x128xf32>
    %c1_5 = arith.constant 1 : index
    %7 = memref.load %arg1[%c1_5] : memref<3xf32, #tpu.memory_space<smem>>
    %8 = vector.broadcast %7 : f32 to vector<8x128xf32>
    %9 = arith.mulf %6, %8 : vector<8x128xf32>
    %10 = arith.addf %4, %9 : vector<8x128xf32>
    %c2 = arith.constant 2 : index
    %c0_6 = arith.constant 0 : index
    %c0_7 = arith.constant 0 : index
    %11 = vector.load %arg3[%c2, %c0_6, %c0_7] : memref<3x8x128xf32, #tpu.memory_space<vmem>>, vector<1x8x128xf32>
    %12 = vector.shape_cast %11 : vector<1x8x128xf32> to vector<8x128xf32>
    %c2_8 = arith.constant 2 : index
    %13 = memref.load %arg1[%c2_8] : memref<3xf32, #tpu.memory_space<smem>>
    %14 = vector.broadcast %13 : f32 to vector<8x128xf32>
    %15 = arith.mulf %12, %14 : vector<8x128xf32>
    %16 = arith.addf %10, %15 : vector<8x128xf32>
    %c0_9 = arith.constant 0 : index
    %17 = memref.load %arg2[%c0_9] : memref<1xf32, #tpu.memory_space<smem>>
    %18 = vector.broadcast %17 : f32 to vector<8x128xf32>
    %19 = arith.addf %16, %18 : vector<8x128xf32>
    %c0_10 = arith.constant 0 : index
    %c0_11 = arith.constant 0 : index
    %20 = vector.load %arg4[%c0_10, %c0_11] : memref<8x128xf32, #tpu.memory_space<vmem>>, vector<8x128xf32>
    tpu.vector_store %arg4[%c0_10, %c0_11], %19 {strides = array<i32>} : memref<8x128xf32, #tpu.memory_space<vmem>>, vector<8x128xf32>,
    return
  }
  func.func @transform_0(%arg0: i32) -> i32 {
    %c0_i32 = arith.constant 0 : i32
    %c0_i32_0 = arith.constant 0 : i32
    return %c0_i32 : i32
  }
  func.func @transform_1(%arg0: i32) -> i32 {
    %c0_i32 = arith.constant 0 : i32
    %c0_i32_0 = arith.constant 0 : i32
    return %c0_i32 : i32
  }
  func.func @transform_2(%arg0: i32) -> (i32, i32, i32) {
    %c0_i32 = arith.constant 0 : i32
    %c0_i32_0 = arith.constant 0 : i32
    %c0_i32_1 = arith.constant 0 : i32
    return %c0_i32, %c0_i32_0, %arg0 : i32, i32, i32
  }
  func.func @transform_3(%arg0: i32) -> (i32, i32) {
    %c0_i32 = arith.constant 0 : i32
    %c0_i32_0 = arith.constant 0 : i32
    return %c0_i32, %arg0 : i32, i32
  }
}

</mosaic_0001>

<llo_original>
// kernel: tpu_custom_call.1
$region0: #{tpu_custom_call.1}
  #allocation0 [shape = 'u32[]', space=smem, size = 0x4, offset = 0x4, fixed_abs, tag = 'smem constant byte address 0x4 - core index']
  #allocation1 [shape = 'u32[144,128]{1,0:T(1,128)}', space=vmem, size = 0x12000, scoped, tag = 'internal scratch']
  #allocation2 [shape = 'f32[1]{0:T(128)S(6)}', space=smem, size = 0x200, scoped, tag = 'scoped memory for tpu_custom_call.1']
  %s0 = inlined_call_operand.vmem [shape: f32[3], index: 0, kind: input, shape index: {}]
  %s1 = inlined_call_operand.<no memory space> [shape: f32[1], index: 1, kind: input, shape index: {}]
  %s2 = inlined_call_operand.hbm [shape: f32[3,8,128], index: 2, kind: input, shape index: {}]
  %s3 = inlined_call_operand.hbm [shape: f32[8,128], index: 3, kind: output, shape index: {}]
  %s4 = sld [smem:[#allocation0]]
  $region30: #{tpu_custom_call.1} parent=0
    _
  %s6 = ssub.s32 1, %s4
  %s7 = scalar_select 0, %s6, %s4
  %8 = sst [smem:[#allocation2]] %s1
  $region1: #{tpu_custom_call.1} parent=0
    #allocation3 [shape = 'u8[512]{0}', space=smem, size = 0x200, scoped, tag = 'input window, operand 0, single buffered']
    #allocation4 [shape = 's32[1]{0}', space=sflag, size = 0x4, scoped, tag = 'scoped memory for tpu_custom_call.1']
    #allocation5 [shape = 's32[1]{0}', space=sflag, size = 0x4, scoped, tag = 'scoped memory for tpu_custom_call.1']
    #allocation6 [shape = 's32[1]{0}', space=sflag, size = 0x4, scoped, tag = 'scoped memory for tpu_custom_call.1']
    #allocation7 [shape = 'u8[12288]{0}', space=vmem, size = 0x3000, scoped, tag = 'input window, operand 2, single buffered']
    #allocation8 [shape = 'u8[4096]{0}', space=vmem, size = 0x1000, scoped, tag = 'output window, operand 0, single buffered']
    %9 = vsyncpa [#allocation6], 0
    %10 = vsyncpa [#allocation4], 0
    %11 = vsyncpa [#allocation5], 0
    // Predicated region
    $region2: #{tpu_custom_call.1} parent=1 // pred_check
      _
    $region3: #{tpu_custom_call.1} parent=1 // pred_check_branch
      %13 = sbr.rel (0) target = $region5
    $region4: #{tpu_custom_call.1} parent=1 // pred_region
      %s15 = ssub.s32 16, 16
      %16 = vsyncadd [#allocation6], %s15
      %s18 = sshll.u32 %s0, 4
      %s19 = int_to_ptr.vmem [resolvable:$true] %s18
      %21 = dma.vmem_to_smem %s19, 16, [#allocation3], [#allocation6]
    $region5: #{tpu_custom_call.1} parent=1 // pred_fallthru
      _
    // Predicated region
    $region6: #{tpu_custom_call.1} parent=1 // pred_check
      _
    $region7: #{tpu_custom_call.1} parent=1 // pred_check_branch
      %23 = sbr.rel (0) target = $region9
    $region8: #{tpu_custom_call.1} parent=1 // pred_region
      _
    $region9: #{tpu_custom_call.1} parent=1 // pred_fallthru
      _
    // Predicated region
    $region10: #{tpu_custom_call.1} parent=1 // pred_check
      _
    $region11: #{tpu_custom_call.1} parent=1 // pred_check_branch
      %25 = sbr.rel (0) target = $region13
    $region12: #{tpu_custom_call.1} parent=1 // pred_region
      %s27 = ssub.s32 384, 384
      %28 = vsyncadd [#allocation4], %s27
      %s29 = sshll.u32 [#allocation7], 4
      %s30 = int_to_ptr.vmem [resolvable:$true] %s29
      %35 = dma.hbm_to_vmem [thread:$0]  %s2, 384, %s30, [#allocation4], 128, 128, 8
    $region13: #{tpu_custom_call.1} parent=1 // pred_fallthru
      _
    // Predicated region
    $region14: #{tpu_custom_call.1} parent=1 // pred_check
      _
    $region15: #{tpu_custom_call.1} parent=1 // pred_check_branch
      %37 = sbr.rel (0) target = $region17
    $region16: #{tpu_custom_call.1} parent=1 // pred_region
      %38 = dma.done [#allocation6], 16
    $region17: #{tpu_custom_call.1} parent=1 // pred_fallthru
      _
    // Predicated region
    $region18: #{tpu_custom_call.1} parent=1 // pred_check
      _
    $region19: #{tpu_custom_call.1} parent=1 // pred_check_branch
      %40 = sbr.rel (0) target = $region21
    $region20: #{tpu_custom_call.1} parent=1 // pred_region
      %41 = dma.done [#allocation4], 384
    $region21: #{tpu_custom_call.1} parent=1 // pred_fallthru
      _
    %42 = sfence
    %v43 = vld [vmem:[#allocation7] sm:$0xff]
    %s44 = sld [smem:[#allocation3]]
    %v45 = vstv %s44
    %v46 = vmul.f32 %v43, %v45
    %s47 = scalar_lea.vmem [#allocation7], 8
    %v48 = vld [vmem:[%s47] sm:$0xff]
    %s49 = sld [smem:[#allocation3 + $0x1]]
    %v50 = vstv %s49
    %v51 = vmul.f32 %v48, %v50
    %v52 = vadd.f32 %v46, %v51
    %s53 = scalar_lea.vmem [#allocation7], 16
    %v54 = vld [vmem:[%s53] sm:$0xff]
    %s55 = sld [smem:[#allocation3 + $0x2]]
    %v56 = vstv %s55
    %v57 = vmul.f32 %v54, %v56
    %v58 = vadd.f32 %v52, %v57
    %s59 = sld [smem:[#allocation2]]
    %v60 = vstv %s59
    %v61 = vadd.f32 %v58, %v60
    %62 = vst [vmem:[#allocation8] sm:$0xff] %v61
    // Predicated region
    $region22: #{tpu_custom_call.1} parent=1 // pred_check
      _
    $region23: #{tpu_custom_call.1} parent=1 // pred_check_branch
      %64 = sbr.rel (0) target = $region25
    $region24: #{tpu_custom_call.1} parent=1 // pred_region
      %s66 = ssub.s32 128, 128
      %67 = vsyncadd [#allocation5], %s66
      %s69 = sshll.u32 [#allocation8], 4
      %s70 = int_to_ptr.vmem [resolvable:$true] %s69
      %72 = dma.vmem_to_hbm [thread:$0]  %s70, 128, %s3, [#allocation5]
    $region25: #{tpu_custom_call.1} parent=1 // pred_fallthru
      _
    // Predicated region
    $region26: #{tpu_custom_call.1} parent=1 // pred_check
      _
    $region27: #{tpu_custom_call.1} parent=1 // pred_check_branch
      %74 = sbr.rel (0) target = $region29
    $region28: #{tpu_custom_call.1} parent=1 // pred_region
      %75 = dma.done [#allocation5], 128
    $region29: #{tpu_custom_call.1} parent=1 // pred_fallthru
      _
    %76 = vsyncpa [#allocation4], 1
    %77 = vsyncpa [#allocation5], 1
    %78 = vsyncpa [#allocation6], 1

</llo_original>
